<compile_context>
chip_gen: v5e
topology: v5e:2x2
jax: 0.10.0
libtpu: 0.0.40
codegen_flags: <defaults>
</compile_context>

<pallas_src>
import jax
import jax.numpy as jnp
from jax.experimental import pallas as pl
from jax.experimental.pallas import tpu as pltpu

LANE = 128
SUBL = 8
KDIM = 8          # padded xyz contraction width (xyz, ||b||^2, zeros)
BIG = 1e30        # sentinel for padded B rows (safe in f32)


# ----------------------------------------------------------------------------
# Pallas kernel: for each point in A, min over B of squared Euclidean distance.
# Grid: (M_tiles, N_tiles); N is the reduction axis (last, "arbitrary").
# ----------------------------------------------------------------------------
def _min_sq_dist_kernel(at_ref, b_ref, a2_ref, o_ref):
    # at_ref : (8, tm)   A coords in sublanes 0..2, sublane 3 = 1.0, rest 0
    # b_ref  : (tn, 8)   B rows: [-2*bx, -2*by, -2*bz, ||b||^2, 0...]
    #                    (padded rows carry ||b||^2 = 1e30)
    # a2_ref : (1, tm)   precomputed ||a_i||^2
    # o_ref  : (1, tm)   min_j ||a_i - b_j||^2   (also the running accumulator)
    n = pl.program_id(1)

    @pl.when(n == 0)
    def _():
        o_ref[...] = jnp.full_like(o_ref, jnp.inf)

    # (tn, tm) tile of (-2 a·b + ||b||^2), entirely on the MXU (K = 8).
    prod = jnp.dot(b_ref[...], at_ref[...],
                   preferred_element_type=jnp.float32)
    # Cross-sublane min (XLU/VPU) -> (1, tm) lane-dense row; accumulate.
    o_ref[...] = jnp.minimum(o_ref[...],
                             jnp.min(prod, axis=0, keepdims=True))

    @pl.when(n == pl.num_programs(1) - 1)
    def _():
        # Add the hoisted ||a||^2 and clamp cancellation negatives to 0.
        o_ref[...] = jnp.maximum(o_ref[...] + a2_ref[...], 0.0)


def _round_up(x, m):
    return ((x + m - 1) // m) * m


def pallas_min_sq_dist(a_pts, b_pts, *, tm=256, tn=2048):
    """min_j ||a_i - b_j||^2 for every row of a_pts.  a_pts:(M,3) b_pts:(N,3)."""
    a_pts = a_pts.astype(jnp.float32)
    b_pts = b_pts.astype(jnp.float32)
    M, N = a_pts.shape[0], b_pts.shape[0]

    # M tiling (lane axis, multiple of 128).  Shrink tm so that small problems
    # still produce >= 2 M tiles (megacore sharding on v7x); 128 is the floor.
    tm = min(tm, max(LANE, _round_up(pl.cdiv(M, 2), LANE)))
    Mp = _round_up(M, tm)

    # N tiling (sublane axis, multiple of 8).  Don't tile wider than padded N.
    tn = min(tn, _round_up(N, SUBL))
    Np = _round_up(N, tn)

    # A operand, transposed: coords in sublanes 0..2, ones in sublane 3
    # (the ones row picks up the ||b||^2 column of B inside the matmul).
    at = jnp.zeros((KDIM, Mp), jnp.float32)
    at = at.at[:3, :M].set(a_pts.T)
    at = at.at[3, :].set(1.0)

    a2 = jnp.zeros((1, Mp), jnp.float32).at[0, :M].set(
        jnp.sum(a_pts * a_pts, axis=1))

    # B operand: [-2*b, ||b||^2, 0...]; padded rows get ||b||^2 = 1e30 so the
    # row-min ignores them with no in-kernel masking.
    b_pad = jnp.zeros((Np, KDIM), jnp.float32)
    b_pad = b_pad.at[:N, :3].set(-2.0 * b_pts)
    b_pad = b_pad.at[:, 3].set(BIG)
    b_pad = b_pad.at[:N, 3].set(jnp.sum(b_pts * b_pts, axis=1))

    out = pl.pallas_call(
        _min_sq_dist_kernel,
        out_shape=jax.ShapeDtypeStruct((1, Mp), jnp.float32),
        grid=(Mp // tm, Np // tn),
        in_specs=[
            pl.BlockSpec((KDIM, tm), lambda i, n: (0, i)),
            pl.BlockSpec((tn, KDIM), lambda i, n: (n, 0)),
            pl.BlockSpec((1, tm), lambda i, n: (0, i)),
        ],
        out_specs=pl.BlockSpec((1, tm), lambda i, n: (0, i)),
        compiler_params=pltpu.CompilerParams(
            dimension_semantics=("parallel", "arbitrary")),
    )(at, b_pad, a2)
    return out[0, :M]


# ----------------------------------------------------------------------------
# Module-equivalent glue
# ----------------------------------------------------------------------------
def _compute_barycenters(vertices, faces):
    return vertices[faces].mean(axis=1)  # (F, 3)


def _adjust_probs(face_probabilities, num_faces):
    # static truncate / zero-pad to match number of simplified faces
    n = face_probabilities.shape[0]
    if n > num_faces:
        return face_probabilities[:num_faces]
    if n < num_faces:
        pad = jnp.zeros((num_faces - n,), face_probabilities.dtype)
        return jnp.concatenate([face_probabilities, pad])
    return face_probabilities


def _sample_points_from_triangles(vertices, faces, num_samples, key):
    face_v = vertices[faces]  # (F, 3, 3)
    k1, k2 = jax.random.split(key)
    F = faces.shape[0]
    r1 = jnp.sqrt(jax.random.uniform(k1, (F, num_samples, 1), jnp.float32))
    r2 = jax.random.uniform(k2, (F, num_samples, 1), jnp.float32)
    a = 1.0 - r1
    b = r1 * (1.0 - r2)
    c = r1 * r2
    samples = (a * face_v[:, None, 0]
               + b * face_v[:, None, 1]
               + c * face_v[:, None, 2])
    return samples.reshape(-1, 3)


class ProbabilisticSurfaceDistanceLoss:
    def __init__(self, k: int = 3, num_samples: int = 100, epsilon: float = 1e-8):
        self.k = k
        self.num_samples = num_samples
        self.epsilon = epsilon
        print(f'Initialized ProbabilisticSurfaceDistanceLoss with k={self.k}, '
              f'num_samples={self.num_samples}')

    def __call__(self, original_vertices, original_faces,
                 simplified_vertices, simplified_faces, face_probabilities,
                 *, rng_key=None):
        if original_vertices.shape[0] == 0 or simplified_vertices.shape[0] == 0:
            return jnp.float32(0.0)
        if rng_key is None:
            rng_key = jax.random.PRNGKey(0)
        fwd = self._forward_term(original_vertices, original_faces,
                                 simplified_vertices, simplified_faces,
                                 face_probabilities)
        rev = self._reverse_term(original_vertices, original_faces,
                                 simplified_vertices, simplified_faces,
                                 face_probabilities, rng_key)
        return fwd + rev

    def _forward_term(self, ov, of, sv, sf, face_probabilities):
        if sf.shape[0] == 0:
            return jnp.float32(0.0)
        simp_bc = _compute_barycenters(sv, sf)
        orig_bc = _compute_barycenters(ov, of)
        min_d = pallas_min_sq_dist(simp_bc, orig_bc)          # (F_s,)
        fp = _adjust_probs(face_probabilities, sf.shape[0])
        total = jnp.sum(fp * min_d) + 1e-4 * jnp.sum(1.0 - fp)
        return total

    def _reverse_term(self, ov, of, sv, sf, face_probabilities, rng_key):
        if sf.shape[0] == 0:
            return jnp.float32(0.0)
        sampled = _sample_points_from_triangles(sv, sf, self.num_samples, rng_key)
        # TODO(synk): the reference `knn(...)` distance convention is ambiguous
        # (squared vs Euclidean); squared distances (pytorch3d knn_points style)
        # are used here.
        min_d = pallas_min_sq_dist(sampled, ov)                # (F_s * S,)
        normalized = min_d / (jnp.max(min_d) + self.epsilon)
        scaled = normalized * 0.1
        fp = _adjust_probs(face_probabilities, sf.shape[0])
        fp_exp = jnp.repeat(fp, self.num_samples)
        rev = jnp.sum(fp_exp * scaled)
        # torch.equal(...) short-circuit: only possible if shapes match
        if ov.shape == sv.shape and of.shape == sf.shape:
            same = jnp.logical_and(jnp.all(ov == sv), jnp.all(of == sf))
            rev = jnp.where(same, jnp.float32(0.0), rev)
        return rev


# ----------------------------------------------------------------------------
if __name__ == "__main__":
    key = jax.random.PRNGKey(0)
    k_ov, k_of, k_sv, k_sf, k_p, k_s = jax.random.split(key, 6)

    n_orig_v, n_orig_f = 64, 40
    n_simp_v, n_simp_f = 32, 16

    original_vertices = jax.random.normal(k_ov, (n_orig_v, 3), jnp.float32)
    original_faces = jax.random.randint(k_of, (n_orig_f, 3), 0, n_orig_v,
                                        dtype=jnp.int32)
    simplified_vertices = jax.random.normal(k_sv, (n_simp_v, 3), jnp.float32)
    simplified_faces = jax.random.randint(k_sf, (n_simp_f, 3), 0, n_simp_v,
                                          dtype=jnp.int32)
    face_probabilities = jax.random.uniform(k_p, (n_simp_f,), jnp.float32)

    loss_fn = ProbabilisticSurfaceDistanceLoss(k=3, num_samples=25, epsilon=1e-8)
    loss = loss_fn(original_vertices, original_faces,
                   simplified_vertices, simplified_faces,
                   face_probabilities, rng_key=k_s)
    loss = jax.block_until_ready(loss)
    assert jnp.isfinite(loss), "loss is not finite"
    print("KERNEL_OK")
</pallas_src>

<mosaic_0001>
module attributes {stable_mosaic.version = 11 : i64} {
  func.func @_min_sq_dist_kernel(%arg0: i32, %arg1: i32, %arg2: memref<8x128xf32, #tpu.memory_space<vmem>>, %arg3: memref<40x8xf32, #tpu.memory_space<vmem>>, %arg4: memref<1x128xf32, #tpu.memory_space<vmem>>, %arg5: memref<1x128xf32, #tpu.memory_space<vmem>>) attributes {dimension_semantics = [#tpu.dimension_semantics<parallel>, #tpu.dimension_semantics<arbitrary>], iteration_bounds = array<i64: 1, 1>, scalar_prefetch = 0 : i64, scratch_operands = 0 : i64, tpu.core_type = #tpu.core_type<tc>, window_params = [{transform_indices = @transform_0, window_bounds = array<i64: 8, 128>}, {transform_indices = @transform_1, window_bounds = array<i64: 40, 8>}, {transform_indices = @transform_2, window_bounds = array<i64: 1, 128>}, {transform_indices = @transform_3, window_bounds = array<i64: 1, 128>}]} {
    %c0_i32 = arith.constant 0 : i32
    %0 = arith.cmpi eq, %arg1, %c0_i32 : i32
    %1 = arith.extui %0 : i1 to i32
    %c0_i32_0 = arith.constant 0 : i32
    %2 = arith.cmpi ne, %1, %c0_i32_0 : i32
    scf.if %2 {
      %cst_11 = arith.constant 0x7F800000 : f32
      %14 = vector.broadcast %cst_11 : f32 to vector<1x128xf32>
      %c0_12 = arith.constant 0 : index
      %c0_13 = arith.constant 0 : index
      %15 = vector.load %arg5[%c0_12, %c0_13] : memref<1x128xf32, #tpu.memory_space<vmem>>, vector<1x128xf32>
      tpu.vector_store %arg5[%c0_12, %c0_13], %14 {strides = array<i32>} : memref<1x128xf32, #tpu.memory_space<vmem>>, vector<1x128xf32>,
    } else {
    }
    %c0 = arith.constant 0 : index
    %c0_1 = arith.constant 0 : index
    %3 = vector.load %arg3[%c0, %c0_1] : memref<40x8xf32, #tpu.memory_space<vmem>>, vector<40x8xf32>
    %c0_2 = arith.constant 0 : index
    %c0_3 = arith.constant 0 : index
    %4 = vector.load %arg2[%c0_2, %c0_3] : memref<8x128xf32, #tpu.memory_space<vmem>>, vector<8x128xf32>
    %cst = arith.constant dense<0.000000e+00> : vector<40x128xf32>
    %5 = tpu.matmul %3, %4, %cst {dimension_numbers = #tpu.dot_dimension_numbers<[1], [0], [0], [1], [0, 0, 1, 1], [], []>} : vector<40x8xf32>, vector<8x128xf32>, vector<40x128xf32> -> vector<40x128xf32>
    %c0_4 = arith.constant 0 : index
    %c0_5 = arith.constant 0 : index
    %6 = vector.load %arg5[%c0_4, %c0_5] : memref<1x128xf32, #tpu.memory_space<vmem>>, vector<1x128xf32>
    %cst_6 = arith.constant dense<0x7F800000> : vector<128xf32>
    %7 = vector.multi_reduction <minimumf>, %5, %cst_6 [0] : vector<40x128xf32> to vector<128xf32>
    %8 = vector.shape_cast %7 : vector<128xf32> to vector<1x128xf32>
    %9 = arith.minimumf %6, %8 : vector<1x128xf32>
    %c0_7 = arith.constant 0 : index
    %c0_8 = arith.constant 0 : index
    %10 = vector.load %arg5[%c0_7, %c0_8] : memref<1x128xf32, #tpu.memory_space<vmem>>, vector<1x128xf32>
    tpu.vector_store %arg5[%c0_7, %c0_8], %9 {strides = array<i32>} : memref<1x128xf32, #tpu.memory_space<vmem>>, vector<1x128xf32>,
    %c0_i32_9 = arith.constant 0 : i32
    %11 = arith.cmpi eq, %arg1, %c0_i32_9 : i32
    %12 = arith.extui %11 : i1 to i32
    %c0_i32_10 = arith.constant 0 : i32
    %13 = arith.cmpi ne, %12, %c0_i32_10 : i32
    scf.if %13 {
      %c0_11 = arith.constant 0 : index
      %c0_12 = arith.constant 0 : index
      %14 = vector.load %arg5[%c0_11, %c0_12] : memref<1x128xf32, #tpu.memory_space<vmem>>, vector<1x128xf32>
      %c0_13 = arith.constant 0 : index
      %c0_14 = arith.constant 0 : index
      %15 = vector.load %arg4[%c0_13, %c0_14] : memref<1x128xf32, #tpu.memory_space<vmem>>, vector<1x128xf32>
      %16 = arith.addf %14, %15 : vector<1x128xf32>
      %cst_15 = arith.constant 0.000000e+00 : f32
      %17 = vector.broadcast %cst_15 : f32 to vector<1x128xf32>
      %18 = arith.maximumf %16, %17 : vector<1x128xf32>
      %c0_16 = arith.constant 0 : index
      %c0_17 = arith.constant 0 : index
      %19 = vector.load %arg5[%c0_16, %c0_17] : memref<1x128xf32, #tpu.memory_space<vmem>>, vector<1x128xf32>
      tpu.vector_store %arg5[%c0_16, %c0_17], %18 {strides = array<i32>} : memref<1x128xf32, #tpu.memory_space<vmem>>, vector<1x128xf32>,
    } else {
    }
    return
  }
  func.func @transform_0(%arg0: i32, %arg1: i32) -> (i32, i32) {
    %c0_i32 = arith.constant 0 : i32
    %c0_i32_0 = arith.constant 0 : i32
    return %c0_i32, %arg0 : i32, i32
  }
  func.func @transform_1(%arg0: i32, %arg1: i32) -> (i32, i32) {
    %c0_i32 = arith.constant 0 : i32
    %c0_i32_0 = arith.constant 0 : i32
    return %arg1, %c0_i32 : i32, i32
  }
  func.func @transform_2(%arg0: i32, %arg1: i32) -> (i32, i32) {
    %c0_i32 = arith.constant 0 : i32
    %c0_i32_0 = arith.constant 0 : i32
    return %c0_i32, %arg0 : i32, i32
  }
  func.func @transform_3(%arg0: i32, %arg1: i32) -> (i32, i32) {
    %c0_i32 = arith.constant 0 : i32
    %c0_i32_0 = arith.constant 0 : i32
    return %c0_i32, %arg0 : i32, i32
  }
}

</mosaic_0001>

<llo_original>
// kernel: tpu_custom_call.1
$region0: #{tpu_custom_call.1}
  #allocation0 [shape = 'u32[]', space=smem, size = 0x4, offset = 0x4, fixed_abs, tag = 'smem constant byte address 0x4 - core index']
  #allocation1 [shape = 'u32[72,128]{1,0:T(1,128)}', space=vmem, size = 0x9000, scoped, tag = 'internal scratch']
  %s0 = inlined_call_operand.vmem [shape: f32[8,128], index: 0, kind: input, shape index: {}]
  %s1 = inlined_call_operand.vmem [shape: f32[40,8], index: 1, kind: input, shape index: {}]
  %s2 = inlined_call_operand.vmem [shape: f32[1,128], index: 2, kind: input, shape index: {}]
  %s3 = inlined_call_operand.hbm [shape: f32[1,128], index: 3, kind: output, shape index: {}]
  %s4 = sld [smem:[#allocation0]]
  $region30: #{tpu_custom_call.1} parent=0
    _
  %s6 = ssub.s32 1, %s4
  %s7 = scalar_select 0, %s6, %s4
  $region1: #{tpu_custom_call.1} parent=0
    #allocation2 [shape = 'u8[512]{0}', space=vmem, size = 0x400, scoped, tag = 'output window, operand 0, single buffered']
    #allocation3 [shape = 's32[1]{0}', space=sflag, size = 0x4, scoped, tag = 'scoped memory for tpu_custom_call.1']
    %8 = vsyncpa [#allocation3], 0
    // Predicated region
    $region2: #{tpu_custom_call.1} parent=1 // pred_check
      _
    $region3: #{tpu_custom_call.1} parent=1 // pred_check_branch
      %10 = sbr.rel (0) target = $region5
    $region4: #{tpu_custom_call.1} parent=1 // pred_region
      _
    $region5: #{tpu_custom_call.1} parent=1 // pred_fallthru
      _
    // Predicated region
    $region6: #{tpu_custom_call.1} parent=1 // pred_check
      _
    $region7: #{tpu_custom_call.1} parent=1 // pred_check_branch
      %12 = sbr.rel (0) target = $region9
    $region8: #{tpu_custom_call.1} parent=1 // pred_region
      _
    $region9: #{tpu_custom_call.1} parent=1 // pred_fallthru
      _
    // Predicated region
    $region10: #{tpu_custom_call.1} parent=1 // pred_check
      _
    $region11: #{tpu_custom_call.1} parent=1 // pred_check_branch
      %14 = sbr.rel (0) target = $region13
    $region12: #{tpu_custom_call.1} parent=1 // pred_region
      _
    $region13: #{tpu_custom_call.1} parent=1 // pred_fallthru
      _
    %p15 = scmp.eq.s32.totalorder 0, 0
    // Predicated region
    $region14: #{tpu_custom_call.1} parent=1 // pred_check
      %p16 = pneg %p15
    $region15: #{tpu_custom_call.1} parent=1 // pred_check_branch
      %18 = sbr.rel (%p16) target = $region17
    $region16: #{tpu_custom_call.1} parent=1 // pred_region
      %19 = vst [vmem:[#allocation2] sm:$0x1] inf
    $region17: #{tpu_custom_call.1} parent=1 // pred_fallthru
      _
    %v20 = vld [vmem:[%s1] sm:$0xff]
    %v21 = vld [vmem:[%s1 + $0x8] sm:$0xff]
    %v22 = vld [vmem:[%s1 + $0x10] sm:$0xff]
    %v23 = vld [vmem:[%s1 + $0x18] sm:$0xff]
    %v24 = vld [vmem:[%s1 + $0x20] sm:$0xff]
    %v25 = vld [vmem:[%s0] sm:$0xff]
    %vm26 = vcmask 64512
    %v28 = vsel %vm26, %v20, 0
    %v31 = vsel %vm26, %v21, 0
    %v34 = vsel %vm26, %v22, 0
    %v37 = vsel %vm26, %v23, 0
    %v40 = vsel %vm26, %v24, 0
    %42 = vmatpush.msra.mxu0 0.0
    %43 = vmatpush.msra.mxu0 0.0
    %44 = vmatpush.msra.mxu0 0.0
    %45 = vmatpush.msra.mxu0 0.0
    %46 = vmatpush.msra.mxu0 0.0
    %47 = vmatpush.msra.mxu0 0.0
    %48 = vmatpush.msra.mxu0 0.0
    %49 = vmatpush.msra.mxu0 0.0
    %50 = vmatpush.msra.mxu0 0.0
    %51 = vmatpush.msra.mxu0 0.0
    %52 = vmatpush.msra.mxu0 0.0
    %53 = vmatpush.msra.mxu0 0.0
    %54 = vmatpush.msra.mxu0 0.0
    %55 = vmatpush.msra.mxu0 0.0
    %56 = vmatpush.msra.mxu0 0.0
    %57 = vmatpush.msra.mxu0 %v25
    %58 = vmatmul.f32.gmra.mxu0 %v28
    %v59 = vpop.f32.mrf.mxu0
    %v60 = vadd.f32 0.0, %v59
    %61 = vmatmul.f32.gmra.mxu0 %v31
    %v62 = vpop.f32.mrf.mxu0
    %v63 = vadd.f32 0.0, %v62
    %64 = vmatmul.f32.gmra.mxu0 %v34
    %v65 = vpop.f32.mrf.mxu0
    %v66 = vadd.f32 0.0, %v65
    %67 = vmatmul.f32.gmra.mxu0 %v37
    %v68 = vpop.f32.mrf.mxu0
    %v69 = vadd.f32 0.0, %v68
    %70 = vmatmul.f32.gmra.mxu0 %v40
    %v71 = vpop.f32.mrf.mxu0
    %v72 = vadd.f32 0.0, %v71
    %73 = vdwg.mxu0
    %v74 = vld [vmem:[#allocation2] sm:$0x1]
    %v75 = vmin.f32 %v60, %v72
    %v76 = vmin.f32 %v75, %v63
    %v77 = vmin.f32 %v66, %v69
    %v78 = vmin.f32 %v76, %v77
    %v79 = vrot.slane %v78, 4
    %v80 = vmin.f32 %v78, %v79
    %v81 = vrot.slane %v80, 2
    %v82 = vmin.f32 %v80, %v81
    %v83 = vrot.slane %v82, 1
    %v84 = vmin.f32 %v82, %v83
    %v85 = vmin.f32 %v74, %v84
    %86 = vst [vmem:[#allocation2] sm:$0x1] %v85
    // Predicated region
    $region18: #{tpu_custom_call.1} parent=1 // pred_check
      %p87 = pneg %p15
    $region19: #{tpu_custom_call.1} parent=1 // pred_check_branch
      %89 = sbr.rel (%p87) target = $region21
    $region20: #{tpu_custom_call.1} parent=1 // pred_region
      %v90 = vld [vmem:[#allocation2] sm:$0x1]
      %v91 = vld [vmem:[%s2] sm:$0x1]
      %v92 = vadd.f32 %v90, %v91
      %v93 = vmax.f32 %v92, 0.0
      %94 = vst [vmem:[#allocation2] sm:$0x1] %v93
    $region21: #{tpu_custom_call.1} parent=1 // pred_fallthru
      _
    // Predicated region
    $region22: #{tpu_custom_call.1} parent=1 // pred_check
      _
    $region23: #{tpu_custom_call.1} parent=1 // pred_check_branch
      %96 = sbr.rel (0) target = $region25
    $region24: #{tpu_custom_call.1} parent=1 // pred_region
      %98 = vsyncadd [#allocation3], 0
      %s100 = sshll.u32 [#allocation2], 4
      %s101 = int_to_ptr.vmem [resolvable:$true] %s100
      %s102 = sshll.u32 %s3, 4
      %s103 = int_to_ptr.hbm [resolvable:$true] %s102
      %105 = dma.vmem_to_hbm [thread:$0]  %s101, 16, %s103, [#allocation3]
    $region25: #{tpu_custom_call.1} parent=1 // pred_fallthru
      _
    // Predicated region
    $region26: #{tpu_custom_call.1} parent=1 // pred_check
      _
    $region27: #{tpu_custom_call.1} parent=1 // pred_check_branch
      %107 = sbr.rel (0) target = $region29
    $region28: #{tpu_custom_call.1} parent=1 // pred_region
      %109 = dma.done [#allocation3], 16
    $region29: #{tpu_custom_call.1} parent=1 // pred_fallthru
      _
    %110 = vsyncpa [#allocation3], 1

</llo_original>
